<compile_context>
chip_gen: v6e
topology: v6e:2x2x1
jax: 0.10.0
libtpu: 0.0.40
codegen_flags: <defaults>
</compile_context>

<pallas_src>
import functools

import jax
import jax.numpy as jnp
import numpy as np
from jax import lax
from jax.experimental import pallas as pl
from jax.experimental.pallas import tpu as pltpu


def _round_up(x, m):
    return (x + m - 1) // m * m


# -----------------------------------------------------------------------------
# Fused Pallas kernel: fc input layer + (depth - 1) message-passing hops.
# -----------------------------------------------------------------------------
def _fused_mpn_kernel(x_ref, wi_ref, bi_ref, g_ref, wh_ref, bh_ref, o_ref, *,
                      depth):
    # input_layer == 'fc':  message = relu(init_messages @ W_i + b_i)
    msg = jnp.maximum(
        jnp.dot(x_ref[...], wi_ref[...], preferred_element_type=jnp.float32)
        + bi_ref[...], 0.0)

    g = g_ref[...]
    wh = wh_ref[...]
    bh = bh_ref[...]

    def hop(_, m):
        # G @ m  ==  nei_message[b2a] - rev_message   (exact selector algebra)
        agg = jnp.dot(g, m, preferred_element_type=jnp.float32)
        # W_h linear + bias + ReLU (dropout is identity in eval mode)
        return jnp.maximum(
            jnp.dot(agg, wh, preferred_element_type=jnp.float32) + bh, 0.0)

    msg = lax.fori_loop(0, depth - 1, hop, msg, unroll=True)
    o_ref[...] = msg


# -----------------------------------------------------------------------------
# Wrapper: build the exact graph operator, pad to MXU-friendly shapes, launch.
# -----------------------------------------------------------------------------
def grover_mpn_encoder_forward(init_messages, a2nei, b2a, b2revb, params,
                               depth):
    """Forward pass of GroverMPNEncoder (bond messages, fc input layer)."""
    nb, d_in = init_messages.shape
    na = a2nei.shape[0]
    h = params["W_i"].shape[1]

    # --- glue: depth-invariant graph operator G (exact count/one-hot algebra)
    # a_nei[i, k] = #{j : a2nei[i, j] == k}   (so a_nei @ msg == gather + sum)
    a_nei = jnp.zeros((na, nb), jnp.float32).at[
        jnp.arange(na)[:, None], a2nei].add(1.0)
    # G[b, k] = a_nei[b2a[b], k] - [k == b2revb[b]]
    g = a_nei[b2a] - jax.nn.one_hot(b2revb, nb, dtype=jnp.float32)   # (NB, NB)

    # --- pad to lane-dense / MXU-aligned shapes (zero padding is neutral) ---
    nbp = _round_up(nb, 128)   # bond rows double as the NB contraction dim
    dp = _round_up(d_in, 128)
    hp = _round_up(h, 128)

    x_p = jnp.zeros((nbp, dp), jnp.float32).at[:nb, :d_in].set(init_messages)
    g_p = jnp.zeros((nbp, nbp), jnp.float32).at[:nb, :nb].set(g)
    wi_p = jnp.zeros((dp, hp), jnp.float32).at[:d_in, :h].set(params["W_i"])
    bi_p = jnp.zeros((1, hp), jnp.float32).at[:, :h].set(params["b_i"])
    wh_p = jnp.zeros((hp, hp), jnp.float32).at[:h, :h].set(params["W_h"])
    bh_p = jnp.zeros((1, hp), jnp.float32).at[:, :h].set(params["b_h"])

    flops = (2 * nbp * dp * hp
             + (depth - 1) * (2 * nbp * nbp * hp + 2 * nbp * hp * hp))
    bytes_accessed = 4 * (x_p.size + wi_p.size + bi_p.size + g_p.size
                          + wh_p.size + bh_p.size + nbp * hp)

    out = pl.pallas_call(
        functools.partial(_fused_mpn_kernel, depth=depth),
        out_shape=jax.ShapeDtypeStruct((nbp, hp), jnp.float32),
        in_specs=[pl.BlockSpec(memory_space=pltpu.MemorySpace.VMEM)
                  for _ in range(6)],
        out_specs=pl.BlockSpec(memory_space=pltpu.MemorySpace.VMEM),
        compiler_params=pltpu.CompilerParams(
            vmem_limit_bytes=32 * 1024 * 1024),
        cost_estimate=pl.CostEstimate(flops=flops, transcendentals=0,
                                      bytes_accessed=bytes_accessed),
    )(x_p, wi_p, bi_p, g_p, wh_p, bh_p)

    return out[:nb, :h]


# -----------------------------------------------------------------------------
# Pure-JAX reference (mirrors the PyTorch forward exactly) for validation
# -----------------------------------------------------------------------------
def reference_forward(init_messages, a2nei, b2a, b2revb, params, depth):
    message = jax.nn.relu(init_messages @ params["W_i"] + params["b_i"])
    for _ in range(depth - 1):
        nei_message = message[a2nei].sum(axis=1)   # _select_neighbor_and_aggregate
        rev_message = message[b2revb]
        message = nei_message[b2a] - rev_message
        message = jax.nn.relu(message @ params["W_h"] + params["b_h"])
    return message


# -----------------------------------------------------------------------------
if __name__ == "__main__":
    key = jax.random.PRNGKey(0)
    k_msg, k_nei, k_b2a, k_wi, k_bi, k_wh, k_bh = jax.random.split(key, 7)

    # Small synthetic molecular graph.
    NUM_ATOMS = 8          # n_atoms
    NUM_BONDS = 16         # n_directed_bonds
    MAX_NB = 4             # max neighbors per atom
    INIT_DIM = 40          # init_message_dim (bond feature dim)
    HIDDEN = 32            # hidden_size
    DEPTH = 3              # message passing depth

    init_messages = jax.random.normal(k_msg, (NUM_BONDS, INIT_DIM),
                                      dtype=jnp.float32)
    a2nei = jax.random.randint(k_nei, (NUM_ATOMS, MAX_NB), 0, NUM_BONDS,
                               dtype=jnp.int32)
    b2a = jax.random.randint(k_b2a, (NUM_BONDS,), 0, NUM_ATOMS,
                             dtype=jnp.int32)
    # directed bonds come in reverse pairs (2k <-> 2k+1)
    b2revb = jnp.array(
        [i + 1 if i % 2 == 0 else i - 1 for i in range(NUM_BONDS)],
        dtype=jnp.int32)

    # Deterministic synthetic parameters (W stored as (in, out): y = x @ W + b).
    params = {
        "W_i": jax.random.normal(k_wi, (INIT_DIM, HIDDEN), jnp.float32) * 0.1,
        "b_i": jax.random.normal(k_bi, (1, HIDDEN), jnp.float32) * 0.1,
        "W_h": jax.random.normal(k_wh, (HIDDEN, HIDDEN), jnp.float32) * 0.1,
        "b_h": jax.random.normal(k_bh, (1, HIDDEN), jnp.float32) * 0.1,
    }

    out = grover_mpn_encoder_forward(init_messages, a2nei, b2a, b2revb,
                                     params, DEPTH)
    out = jax.block_until_ready(out)

    ref = reference_forward(init_messages, a2nei, b2a, b2revb, params, DEPTH)
    ref = jax.block_until_ready(ref)

    assert out.shape == (NUM_BONDS, HIDDEN)
    np.testing.assert_allclose(np.asarray(out), np.asarray(ref),
                               rtol=1e-5, atol=1e-5)
    print("KERNEL_OK")
</pallas_src>

<mosaic_0001>
module attributes {stable_mosaic.version = 11 : i64} {
  func.func @_fused_mpn_kernel(%arg0: memref<128x128xf32, #tpu.memory_space<vmem>>, %arg1: memref<128x128xf32, #tpu.memory_space<vmem>>, %arg2: memref<1x128xf32, #tpu.memory_space<vmem>>, %arg3: memref<128x128xf32, #tpu.memory_space<vmem>>, %arg4: memref<128x128xf32, #tpu.memory_space<vmem>>, %arg5: memref<1x128xf32, #tpu.memory_space<vmem>>, %arg6: memref<128x128xf32, #tpu.memory_space<vmem>>) attributes {dimension_semantics = [], scalar_prefetch = 0 : i64, scratch_operands = 0 : i64, tpu.core_type = #tpu.core_type<tc>} {
    %c0 = arith.constant 0 : index
    %c0_0 = arith.constant 0 : index
    %0 = vector.load %arg0[%c0, %c0_0] : memref<128x128xf32, #tpu.memory_space<vmem>>, vector<128x128xf32>
    %c0_1 = arith.constant 0 : index
    %c0_2 = arith.constant 0 : index
    %1 = vector.load %arg1[%c0_1, %c0_2] : memref<128x128xf32, #tpu.memory_space<vmem>>, vector<128x128xf32>
    %cst = arith.constant dense<0.000000e+00> : vector<128x128xf32>
    %2 = tpu.matmul %0, %1, %cst {dimension_numbers = #tpu.dot_dimension_numbers<[1], [0], [0], [1], [0, 0, 1, 1], [], []>} : vector<128x128xf32>, vector<128x128xf32>, vector<128x128xf32> -> vector<128x128xf32>
    %c0_3 = arith.constant 0 : index
    %c0_4 = arith.constant 0 : index
    %3 = vector.load %arg2[%c0_3, %c0_4] : memref<1x128xf32, #tpu.memory_space<vmem>>, vector<1x128xf32>
    %4 = vector.broadcast %3 : vector<1x128xf32> to vector<128x128xf32>
    %5 = arith.addf %2, %4 : vector<128x128xf32>
    %cst_5 = arith.constant 0.000000e+00 : f32
    %6 = vector.broadcast %cst_5 : f32 to vector<128x128xf32>
    %7 = arith.maximumf %5, %6 : vector<128x128xf32>
    %c0_6 = arith.constant 0 : index
    %c0_7 = arith.constant 0 : index
    %8 = vector.load %arg3[%c0_6, %c0_7] : memref<128x128xf32, #tpu.memory_space<vmem>>, vector<128x128xf32>
    %c0_8 = arith.constant 0 : index
    %c0_9 = arith.constant 0 : index
    %9 = vector.load %arg4[%c0_8, %c0_9] : memref<128x128xf32, #tpu.memory_space<vmem>>, vector<128x128xf32>
    %c0_10 = arith.constant 0 : index
    %c0_11 = arith.constant 0 : index
    %10 = vector.load %arg5[%c0_10, %c0_11] : memref<1x128xf32, #tpu.memory_space<vmem>>, vector<1x128xf32>
    %c0_i32 = arith.constant 0 : i32
    %cst_12 = arith.constant dense<0.000000e+00> : vector<128x128xf32>
    %11 = tpu.matmul %8, %7, %cst_12 {dimension_numbers = #tpu.dot_dimension_numbers<[1], [0], [0], [1], [0, 0, 1, 1], [], []>} : vector<128x128xf32>, vector<128x128xf32>, vector<128x128xf32> -> vector<128x128xf32>
    %cst_13 = arith.constant dense<0.000000e+00> : vector<128x128xf32>
    %12 = tpu.matmul %11, %9, %cst_13 {dimension_numbers = #tpu.dot_dimension_numbers<[1], [0], [0], [1], [0, 0, 1, 1], [], []>} : vector<128x128xf32>, vector<128x128xf32>, vector<128x128xf32> -> vector<128x128xf32>
    %13 = vector.broadcast %10 : vector<1x128xf32> to vector<128x128xf32>
    %14 = arith.addf %12, %13 : vector<128x128xf32>
    %cst_14 = arith.constant 0.000000e+00 : f32
    %15 = vector.broadcast %cst_14 : f32 to vector<128x128xf32>
    %16 = arith.maximumf %14, %15 : vector<128x128xf32>
    %c1_i32 = arith.constant 1 : i32
    %cst_15 = arith.constant dense<0.000000e+00> : vector<128x128xf32>
    %17 = tpu.matmul %8, %16, %cst_15 {dimension_numbers = #tpu.dot_dimension_numbers<[1], [0], [0], [1], [0, 0, 1, 1], [], []>} : vector<128x128xf32>, vector<128x128xf32>, vector<128x128xf32> -> vector<128x128xf32>
    %cst_16 = arith.constant dense<0.000000e+00> : vector<128x128xf32>
    %18 = tpu.matmul %17, %9, %cst_16 {dimension_numbers = #tpu.dot_dimension_numbers<[1], [0], [0], [1], [0, 0, 1, 1], [], []>} : vector<128x128xf32>, vector<128x128xf32>, vector<128x128xf32> -> vector<128x128xf32>
    %19 = vector.broadcast %10 : vector<1x128xf32> to vector<128x128xf32>
    %20 = arith.addf %18, %19 : vector<128x128xf32>
    %cst_17 = arith.constant 0.000000e+00 : f32
    %21 = vector.broadcast %cst_17 : f32 to vector<128x128xf32>
    %22 = arith.maximumf %20, %21 : vector<128x128xf32>
    %c0_18 = arith.constant 0 : index
    %c0_19 = arith.constant 0 : index
    %23 = vector.load %arg6[%c0_18, %c0_19] : memref<128x128xf32, #tpu.memory_space<vmem>>, vector<128x128xf32>
    tpu.vector_store %arg6[%c0_18, %c0_19], %22 {strides = array<i32>} : memref<128x128xf32, #tpu.memory_space<vmem>>, vector<128x128xf32>,
    return
  }
}

</mosaic_0001>

<llo_original>
// kernel: tpu_custom_call.1
$region0: #{tpu_custom_call.1}
  #allocation0 [shape = 'u32[]', space=smem, size = 0x4, offset = 0x4, fixed_abs, tag = 'smem constant byte address 0x4 - core index']
  #allocation1 [shape = 'u32[144,128]{1,0:T(1,128)}', space=vmem, size = 0x12000, scoped, tag = 'internal scratch']
  %s0 = inlined_call_operand.hbm [shape: f32[128,128], index: 0, kind: input, shape index: {}]
  %s1 = inlined_call_operand.hbm [shape: f32[128,128], index: 1, kind: input, shape index: {}]
  %s2 = inlined_call_operand.vmem [shape: f32[1,128], index: 2, kind: input, shape index: {}]
  %s3 = inlined_call_operand.hbm [shape: f32[128,128], index: 3, kind: input, shape index: {}]
  %s4 = inlined_call_operand.hbm [shape: f32[128,128], index: 4, kind: input, shape index: {}]
  %s5 = inlined_call_operand.vmem [shape: f32[1,128], index: 5, kind: input, shape index: {}]
  %s6 = inlined_call_operand.hbm [shape: f32[128,128], index: 6, kind: output, shape index: {}]
  %s7 = sld [smem:[#allocation0]]
  $region50: #{tpu_custom_call.1} parent=0
    _
  %s9 = ssub.s32 1, %s7
  %s10 = scalar_select 0, %s9, %s7
  $region1: #{tpu_custom_call.1} parent=0
    #allocation2 [shape = 'u8[65536]{0}', space=vmem, size = 0x10000, scoped, tag = 'input window, operand 0, single buffered']
    #allocation3 [shape = 's32[1]{0}', space=sflag, size = 0x4, scoped, tag = 'scoped memory for tpu_custom_call.1']
    #allocation4 [shape = 's32[1]{0}', space=sflag, size = 0x4, scoped, tag = 'scoped memory for tpu_custom_call.1']
    #allocation5 [shape = 'u8[65536]{0}', space=vmem, size = 0x10000, scoped, tag = 'input window, operand 1, single buffered']
    #allocation6 [shape = 's32[1]{0}', space=sflag, size = 0x4, scoped, tag = 'scoped memory for tpu_custom_call.1']
    #allocation7 [shape = 'u8[65536]{0}', space=vmem, size = 0x10000, scoped, tag = 'input window, operand 3, single buffered']
    #allocation8 [shape = 'u8[65536]{0}', space=vmem, size = 0x10000, scoped, tag = 'input window, operand 4, single buffered']
    #allocation9 [shape = 's32[1]{0}', space=sflag, size = 0x4, scoped, tag = 'scoped memory for tpu_custom_call.1']
    #allocation10 [shape = 'u8[65536]{0}', space=vmem, size = 0x10000, scoped, tag = 'output window, operand 0, single buffered']
    %11 = vsyncpa [#allocation3], 0
    %12 = vsyncpa [#allocation6], 0
    %13 = vsyncpa [#allocation9], 0
    %14 = vsyncpa [#allocation4], 0
    // Predicated region
    $region2: #{tpu_custom_call.1} parent=1 // pred_check
      _
    $region3: #{tpu_custom_call.1} parent=1 // pred_check_branch
      %16 = sbr.rel (0) target = $region5
    $region4: #{tpu_custom_call.1} parent=1 // pred_region
      %s18 = ssub.s32 2048, 2048
      %19 = vsyncadd [#allocation3], %s18
      %s20 = sshll.u32 [#allocation2], 4
      %s21 = int_to_ptr.vmem [resolvable:$true] %s20
      %26 = dma.hbm_to_vmem [thread:$0]  %s0, 2048, %s21, [#allocation3], 128, 128, 8
    $region5: #{tpu_custom_call.1} parent=1 // pred_fallthru
      _
    // Predicated region
    $region6: #{tpu_custom_call.1} parent=1 // pred_check
      _
    $region7: #{tpu_custom_call.1} parent=1 // pred_check_branch
      %28 = sbr.rel (0) target = $region9
    $region8: #{tpu_custom_call.1} parent=1 // pred_region
      %s30 = ssub.s32 2048, 2048
      %31 = vsyncadd [#allocation6], %s30
      %s32 = sshll.u32 [#allocation5], 4
      %s33 = int_to_ptr.vmem [resolvable:$true] %s32
      %38 = dma.hbm_to_vmem [thread:$0]  %s1, 2048, %s33, [#allocation6], 128, 128, 8
    $region9: #{tpu_custom_call.1} parent=1 // pred_fallthru
      _
    // Predicated region
    $region10: #{tpu_custom_call.1} parent=1 // pred_check
      _
    $region11: #{tpu_custom_call.1} parent=1 // pred_check_branch
      %40 = sbr.rel (0) target = $region13
    $region12: #{tpu_custom_call.1} parent=1 // pred_region
      _
    $region13: #{tpu_custom_call.1} parent=1 // pred_fallthru
      _
    // Predicated region
    $region14: #{tpu_custom_call.1} parent=1 // pred_check
      _
    $region15: #{tpu_custom_call.1} parent=1 // pred_check_branch
      %42 = sbr.rel (0) target = $region17
    $region16: #{tpu_custom_call.1} parent=1 // pred_region
      %s44 = ssub.s32 2048, 2048
      %45 = vsyncadd [#allocation6], %s44
      %s46 = sshll.u32 [#allocation7], 4
      %s47 = int_to_ptr.vmem [resolvable:$true] %s46
      %52 = dma.hbm_to_vmem [thread:$0]  %s3, 2048, %s47, [#allocation6], 128, 128, 8
    $region17: #{tpu_custom_call.1} parent=1 // pred_fallthru
      _
    // Predicated region
    $region18: #{tpu_custom_call.1} parent=1 // pred_check
      _
    $region19: #{tpu_custom_call.1} parent=1 // pred_check_branch
      %54 = sbr.rel (0) target = $region21
    $region20: #{tpu_custom_call.1} parent=1 // pred_region
      %s56 = ssub.s32 2048, 2048
      %57 = vsyncadd [#allocation9], %s56
      %s58 = sshll.u32 [#allocation8], 4
      %s59 = int_to_ptr.vmem [resolvable:$true] %s58
      %64 = dma.hbm_to_vmem [thread:$0]  %s4, 2048, %s59, [#allocation9], 128, 128, 8
    $region21: #{tpu_custom_call.1} parent=1 // pred_fallthru
      _
    // Predicated region
    $region22: #{tpu_custom_call.1} parent=1 // pred_check
      _
    $region23: #{tpu_custom_call.1} parent=1 // pred_check_branch
      %66 = sbr.rel (0) target = $region25
    $region24: #{tpu_custom_call.1} parent=1 // pred_region
      _
    $region25: #{tpu_custom_call.1} parent=1 // pred_fallthru
      _
    // Predicated region
    $region26: #{tpu_custom_call.1} parent=1 // pred_check
      _
    $region27: #{tpu_custom_call.1} parent=1 // pred_check_branch
      %68 = sbr.rel (0) target = $region29
    $region28: #{tpu_custom_call.1} parent=1 // pred_region
      %69 = dma.done [#allocation3], 2048
    $region29: #{tpu_custom_call.1} parent=1 // pred_fallthru
      _
    // Predicated region
    $region30: #{tpu_custom_call.1} parent=1 // pred_check
      _
    $region31: #{tpu_custom_call.1} parent=1 // pred_check_branch
      %71 = sbr.rel (0) target = $region33
    $region32: #{tpu_custom_call.1} parent=1 // pred_region
      %72 = dma.done [#allocation6], 2048
    $region33: #{tpu_custom_call.1} parent=1 // pred_fallthru
      _
    // Predicated region
    $region34: #{tpu_custom_call.1} parent=1 // pred_check
      _
    $region35: #{tpu_custom_call.1} parent=1 // pred_check_branch
      %74 = sbr.rel (0) target = $region37
    $region36: #{tpu_custom_call.1} parent=1 // pred_region
      %75 = dma.done [#allocation6], 2048
    $region37: #{tpu_custom_call.1} parent=1 // pred_fallthru
      _
    // Predicated region
    $region38: #{tpu_custom_call.1} parent=1 // pred_check
      _
    $region39: #{tpu_custom_call.1} parent=1 // pred_check_branch
      %77 = sbr.rel (0) target = $region41
    $region40: #{tpu_custom_call.1} parent=1 // pred_region
      %78 = dma.done [#allocation9], 2048
    $region41: #{tpu_custom_call.1} parent=1 // pred_fallthru
      _
    %v79 = vld [vmem:[#allocation2] sm:$0xff]
    %v80 = vld [vmem:[#allocation2 + $0x8] sm:$0xff]
    %v81 = vld [vmem:[#allocation2 + $0x10] sm:$0xff]
    %v82 = vld [vmem:[#allocation2 + $0x18] sm:$0xff]
    %v83 = vld [vmem:[#allocation2 + $0x20] sm:$0xff]
    %v84 = vld [vmem:[#allocation2 + $0x28] sm:$0xff]
    %v85 = vld [vmem:[#allocation2 + $0x30] sm:$0xff]
    %v86 = vld [vmem:[#allocation2 + $0x38] sm:$0xff]
    %v87 = vld [vmem:[#allocation2 + $0x40] sm:$0xff]
    %v88 = vld [vmem:[#allocation2 + $0x48] sm:$0xff]
    %v89 = vld [vmem:[#allocation2 + $0x50] sm:$0xff]
    %v90 = vld [vmem:[#allocation2 + $0x58] sm:$0xff]
    %v91 = vld [vmem:[#allocation2 + $0x60] sm:$0xff]
    %v92 = vld [vmem:[#allocation2 + $0x68] sm:$0xff]
    %v93 = vld [vmem:[#allocation2 + $0x70] sm:$0xff]
    %v94 = vld [vmem:[#allocation2 + $0x78] sm:$0xff]
    %v95 = vld [vmem:[#allocation5] sm:$0xff]
    %v96 = vld [vmem:[#allocation5 + $0x8] sm:$0xff]
    %v97 = vld [vmem:[#allocation5 + $0x10] sm:$0xff]
    %v98 = vld [vmem:[#allocation5 + $0x18] sm:$0xff]
    %v99 = vld [vmem:[#allocation5 + $0x20] sm:$0xff]
    %v100 = vld [vmem:[#allocation5 + $0x28] sm:$0xff]
    %v101 = vld [vmem:[#allocation5 + $0x30] sm:$0xff]
    %v102 = vld [vmem:[#allocation5 + $0x38] sm:$0xff]
    %v103 = vld [vmem:[#allocation5 + $0x40] sm:$0xff]
    %v104 = vld [vmem:[#allocation5 + $0x48] sm:$0xff]
    %v105 = vld [vmem:[#allocation5 + $0x50] sm:$0xff]
    %v106 = vld [vmem:[#allocation5 + $0x58] sm:$0xff]
    %v107 = vld [vmem:[#allocation5 + $0x60] sm:$0xff]
    %v108 = vld [vmem:[#allocation5 + $0x68] sm:$0xff]
    %v109 = vld [vmem:[#allocation5 + $0x70] sm:$0xff]
    %v110 = vld [vmem:[#allocation5 + $0x78] sm:$0xff]
    %v111 = vld [vmem:[%s2] sm:$0x1]
    %v113 = vlaneseq
    %v114 = vshrl.u32 %v113, 7
    %v115 = vsub.s32 0, %v114
    %v116 = vrot.slane %v111, %v115
    %118 = vmatprep.subr.mxu0 0.0
    %119 = vmatpush1.msra.mxu0 %v110
    %120 = vmatprep.subr.mxu0 0.0
    %121 = vmatpush1.msra.mxu0 %v109
    %122 = vmatprep.subr.mxu0 0.0
    %123 = vmatpush1.msra.mxu0 %v108
    %124 = vmatprep.subr.mxu0 0.0
    %125 = vmatpush1.msra.mxu0 %v107
    %126 = vmatprep.subr.mxu0 0.0
    %127 = vmatpush1.msra.mxu0 %v106
    %128 = vmatprep.subr.mxu0 0.0
    %129 = vmatpush1.msra.mxu0 %v105
    %130 = vmatprep.subr.mxu0 0.0
    %131 = vmatpush1.msra.mxu0 %v104
    %132 = vmatprep.subr.mxu0 0.0
    %133 = vmatpush1.msra.mxu0 %v103
    %134 = vmatprep.subr.mxu0 0.0
    %135 = vmatpush1.msra.mxu0 %v102
    %136 = vmatprep.subr.mxu0 0.0
    %137 = vmatpush1.msra.mxu0 %v101
    %138 = vmatprep.subr.mxu0 0.0
    %139 = vmatpush1.msra.mxu0 %v100
    %140 = vmatprep.subr.mxu0 0.0
    %141 = vmatpush1.msra.mxu0 %v99
    %142 = vmatprep.subr.mxu0 0.0
    %143 = vmatpush1.msra.mxu0 %v98
    %144 = vmatprep.subr.mxu0 0.0
    %145 = vmatpush1.msra.mxu0 %v97
    %146 = vmatprep.subr.mxu0 0.0
    %147 = vmatpush1.msra.mxu0 %v96
    %148 = vmatprep.subr.mxu0 0.0
    %149 = vmatpush1.msra.mxu0 %v95
    %150 = vmatprep.subr.mxu0 0.0
    %151 = vmatpush2.msra.mxu0 0.0
    %152 = vmatprep.subr.mxu0 0.0
    %153 = vmatpush2.msra.mxu0 0.0
    %154 = vmatprep.subr.mxu0 0.0
    %155 = vmatpush2.msra.mxu0 0.0
    %156 = vmatprep.subr.mxu0 0.0
    %157 = vmatpush2.msra.mxu0 0.0
    %158 = vmatprep.subr.mxu0 0.0
    %159 = vmatpush2.msra.mxu0 0.0
    %160 = vmatprep.subr.mxu0 0.0
    %161 = vmatpush2.msra.mxu0 0.0
    %162 = vmatprep.subr.mxu0 0.0
    %163 = vmatpush2.msra.mxu0 0.0
    %164 = vmatprep.subr.mxu0 0.0
    %165 = vmatpush2.msra.mxu0 0.0
    %166 = vmatprep.subr.mxu0 0.0
    %167 = vmatpush2.msra.mxu0 0.0
    %168 = vmatprep.subr.mxu0 0.0
    %169 = vmatpush2.msra.mxu0 0.0
    %170 = vmatprep.subr.mxu0 0.0
    %171 = vmatpush2.msra.mxu0 0.0
    %172 = vmatprep.subr.mxu0 0.0
    %173 = vmatpush2.msra.mxu0 0.0
    %174 = vmatprep.subr.mxu0 0.0
    %175 = vmatpush2.msra.mxu0 0.0
    %176 = vmatprep.subr.mxu0 0.0
    %177 = vmatpush2.msra.mxu0 0.0
    %178 = vmatprep.subr.mxu0 0.0
    %179 = vmatpush2.msra.mxu0 0.0
    %180 = vmatprep.subr.mxu0 0.0
    %181 = vmatpush2.msra.mxu0 0.0
    %182 = vmatprep.mubr.f32.mxu0 0.0
    %183 = vmatmul.mubr.f32.gmra.mxu0 %v79
    %v184 = vpop.f32.mrf.mxu0
    %v185 = vadd.f32 %v116, %v184
    %v186 = vpop.f32.mrf.mxu0
    %187 = vmatprep.mubr.f32.mxu0 0.0
    %188 = vmatmul.mubr.f32.gmra.mxu0 %v80
    %v189 = vpop.f32.mrf.mxu0
    %v190 = vadd.f32 %v116, %v189
    %v191 = vpop.f32.mrf.mxu0
    %192 = vmatprep.mubr.f32.mxu0 0.0
    %193 = vmatmul.mubr.f32.gmra.mxu0 %v81
    %v194 = vpop.f32.mrf.mxu0
    %v195 = vadd.f32 %v116, %v194
    %v196 = vpop.f32.mrf.mxu0
    %197 = vmatprep.mubr.f32.mxu0 0.0
    %198 = vmatmul.mubr.f32.gmra.mxu0 %v82
    %v199 = vpop.f32.mrf.mxu0
    %v200 = vadd.f32 %v116, %v199
    %v201 = vpop.f32.mrf.mxu0
    %202 = vmatprep.mubr.f32.mxu0 0.0
    %203 = vmatmul.mubr.f32.gmra.mxu0 %v83
    %v204 = vpop.f32.mrf.mxu0
    %v205 = vadd.f32 %v116, %v204
    %v206 = vpop.f32.mrf.mxu0
    %207 = vmatprep.mubr.f32.mxu0 0.0
    %208 = vmatmul.mubr.f32.gmra.mxu0 %v84
    %v209 = vpop.f32.mrf.mxu0
    %v210 = vadd.f32 %v116, %v209
    %v211 = vpop.f32.mrf.mxu0
    %212 = vmatprep.mubr.f32.mxu0 0.0
    %213 = vmatmul.mubr.f32.gmra.mxu0 %v85
    %v214 = vpop.f32.mrf.mxu0
    %v215 = vadd.f32 %v116, %v214
    %v216 = vpop.f32.mrf.mxu0
    %217 = vmatprep.mubr.f32.mxu0 0.0
    %218 = vmatmul.mubr.f32.gmra.mxu0 %v86
    %v219 = vpop.f32.mrf.mxu0
    %v220 = vadd.f32 %v116, %v219
    %v221 = vpop.f32.mrf.mxu0
    %222 = vmatprep.mubr.f32.mxu0 0.0
    %223 = vmatmul.mubr.f32.gmra.mxu0 %v87
    %v224 = vpop.f32.mrf.mxu0
    %v225 = vadd.f32 %v116, %v224
    %v226 = vpop.f32.mrf.mxu0
    %227 = vmatprep.mubr.f32.mxu0 0.0
    %228 = vmatmul.mubr.f32.gmra.mxu0 %v88
    %v229 = vpop.f32.mrf.mxu0
    %v230 = vadd.f32 %v116, %v229
    %v231 = vpop.f32.mrf.mxu0
    %232 = vmatprep.mubr.f32.mxu0 0.0
    %233 = vmatmul.mubr.f32.gmra.mxu0 %v89
    %v234 = vpop.f32.mrf.mxu0
    %v235 = vadd.f32 %v116, %v234
    %v236 = vpop.f32.mrf.mxu0
    %237 = vmatprep.mubr.f32.mxu0 0.0
    %238 = vmatmul.mubr.f32.gmra.mxu0 %v90
    %v239 = vpop.f32.mrf.mxu0
    %v240 = vadd.f32 %v116, %v239
    %v241 = vpop.f32.mrf.mxu0
    %242 = vmatprep.mubr.f32.mxu0 0.0
    %243 = vmatmul.mubr.f32.gmra.mxu0 %v91
    %v244 = vpop.f32.mrf.mxu0
    %v245 = vadd.f32 %v116, %v244
    %v246 = vpop.f32.mrf.mxu0
    %247 = vmatprep.mubr.f32.mxu0 0.0
    %248 = vmatmul.mubr.f32.gmra.mxu0 %v92
    %v249 = vpop.f32.mrf.mxu0
    %v250 = vadd.f32 %v116, %v249
    %v251 = vpop.f32.mrf.mxu0
    %252 = vmatprep.mubr.f32.mxu0 0.0
    %253 = vmatmul.mubr.f32.gmra.mxu0 %v93
    %v254 = vpop.f32.mrf.mxu0
    %v255 = vadd.f32 %v116, %v254
    %v256 = vpop.f32.mrf.mxu0
    %257 = vmatprep.mubr.f32.mxu0 0.0
    %258 = vmatmul.mubr.f32.gmra.mxu0 %v94
    %v259 = vpop.f32.mrf.mxu0
    %v260 = vadd.f32 %v116, %v259
    %v261 = vpop.f32.mrf.mxu0
    %262 = vdwg.mxu0
    %v263 = vmax.f32 %v185, 0.0
    %v264 = vmax.f32 %v190, 0.0
    %v265 = vmax.f32 %v195, 0.0
    %v266 = vmax.f32 %v200, 0.0
    %v267 = vmax.f32 %v205, 0.0
    %v268 = vmax.f32 %v210, 0.0
    %v269 = vmax.f32 %v215, 0.0
    %v270 = vmax.f32 %v220, 0.0
    %v271 = vmax.f32 %v225, 0.0
    %v272 = vmax.f32 %v230, 0.0
    %v273 = vmax.f32 %v235, 0.0
    %v274 = vmax.f32 %v240, 0.0
    %v275 = vmax.f32 %v245, 0.0
    %v276 = vmax.f32 %v250, 0.0
    %v277 = vmax.f32 %v255, 0.0
    %v278 = vmax.f32 %v260, 0.0
    %v279 = vld [vmem:[#allocation7] sm:$0xff]
    %v280 = vld [vmem:[#allocation7 + $0x8] sm:$0xff]
    %v281 = vld [vmem:[#allocation7 + $0x10] sm:$0xff]
    %v282 = vld [vmem:[#allocation7 + $0x18] sm:$0xff]
    %v283 = vld [vmem:[#allocation7 + $0x20] sm:$0xff]
    %v284 = vld [vmem:[#allocation7 + $0x28] sm:$0xff]
    %v285 = vld [vmem:[#allocation7 + $0x30] sm:$0xff]
    %v286 = vld [vmem:[#allocation7 + $0x38] sm:$0xff]
    %v287 = vld [vmem:[#allocation7 + $0x40] sm:$0xff]
    %v288 = vld [vmem:[#allocation7 + $0x48] sm:$0xff]
    %v289 = vld [vmem:[#allocation7 + $0x50] sm:$0xff]
    %v290 = vld [vmem:[#allocation7 + $0x58] sm:$0xff]
    %v291 = vld [vmem:[#allocation7 + $0x60] sm:$0xff]
    %v292 = vld [vmem:[#allocation7 + $0x68] sm:$0xff]
    %v293 = vld [vmem:[#allocation7 + $0x70] sm:$0xff]
    %v294 = vld [vmem:[#allocation7 + $0x78] sm:$0xff]
    %v295 = vld [vmem:[#allocation8] sm:$0xff]
    %v296 = vld [vmem:[#allocation8 + $0x8] sm:$0xff]
    %v297 = vld [vmem:[#allocation8 + $0x10] sm:$0xff]
    %v298 = vld [vmem:[#allocation8 + $0x18] sm:$0xff]
    %v299 = vld [vmem:[#allocation8 + $0x20] sm:$0xff]
    %v300 = vld [vmem:[#allocation8 + $0x28] sm:$0xff]
    %v301 = vld [vmem:[#allocation8 + $0x30] sm:$0xff]
    %v302 = vld [vmem:[#allocation8 + $0x38] sm:$0xff]
    %v303 = vld [vmem:[#allocation8 + $0x40] sm:$0xff]
    %v304 = vld [vmem:[#allocation8 + $0x48] sm:$0xff]
    %v305 = vld [vmem:[#allocation8 + $0x50] sm:$0xff]
    %v306 = vld [vmem:[#allocation8 + $0x58] sm:$0xff]
    %v307 = vld [vmem:[#allocation8 + $0x60] sm:$0xff]
    %v308 = vld [vmem:[#allocation8 + $0x68] sm:$0xff]
    %v309 = vld [vmem:[#allocation8 + $0x70] sm:$0xff]
    %v310 = vld [vmem:[#allocation8 + $0x78] sm:$0xff]
    %v311 = vld [vmem:[%s5] sm:$0x1]
    %312 = vmatprep.subr.mxu0 0.0
    %313 = vmatpush1.msra.mxu0 %v278
    %314 = vmatprep.subr.mxu0 0.0
    %315 = vmatpush1.msra.mxu0 %v277
    %316 = vmatprep.subr.mxu0 0.0
    %317 = vmatpush1.msra.mxu0 %v276
    %318 = vmatprep.subr.mxu0 0.0
    %319 = vmatpush1.msra.mxu0 %v275
    %320 = vmatprep.subr.mxu0 0.0
    %321 = vmatpush1.msra.mxu0 %v274
    %322 = vmatprep.subr.mxu0 0.0
    %323 = vmatpush1.msra.mxu0 %v273
    %324 = vmatprep.subr.mxu0 0.0
    %325 = vmatpush1.msra.mxu0 %v272
    %326 = vmatprep.subr.mxu0 0.0
    %327 = vmatpush1.msra.mxu0 %v271
    %328 = vmatprep.subr.mxu0 0.0
    %329 = vmatpush1.msra.mxu0 %v270
    %330 = vmatprep.subr.mxu0 0.0
    %331 = vmatpush1.msra.mxu0 %v269
    %332 = vmatprep.subr.mxu0 0.0
    %333 = vmatpush1.msra.mxu0 %v268
    %334 = vmatprep.subr.mxu0 0.0
    %335 = vmatpush1.msra.mxu0 %v267
    %336 = vmatprep.subr.mxu0 0.0
    %337 = vmatpush1.msra.mxu0 %v266
    %338 = vmatprep.subr.mxu0 0.0
    %339 = vmatpush1.msra.mxu0 %v265
    %340 = vmatprep.subr.mxu0 0.0
    %341 = vmatpush1.msra.mxu0 %v264
    %342 = vmatprep.subr.mxu0 0.0
    %343 = vmatpush1.msra.mxu0 %v263
    %344 = vmatprep.subr.mxu0 0.0
    %345 = vmatpush2.msra.mxu0 0.0
    %346 = vmatprep.subr.mxu0 0.0
    %347 = vmatpush2.msra.mxu0 0.0
    %348 = vmatprep.subr.mxu0 0.0
    %349 = vmatpush2.msra.mxu0 0.0
    %350 = vmatprep.subr.mxu0 0.0
    %351 = vmatpush2.msra.mxu0 0.0
    %352 = vmatprep.subr.mxu0 0.0
    %353 = vmatpush2.msra.mxu0 0.0
    %354 = vmatprep.subr.mxu0 0.0
    %355 = vmatpush2.msra.mxu0 0.0
    %356 = vmatprep.subr.mxu0 0.0
    %357 = vmatpush2.msra.mxu0 0.0
    %358 = vmatprep.subr.mxu0 0.0
    %359 = vmatpush2.msra.mxu0 0.0
    %360 = vmatprep.subr.mxu0 0.0
    %361 = vmatpush2.msra.mxu0 0.0
    %362 = vmatprep.subr.mxu0 0.0
    %363 = vmatpush2.msra.mxu0 0.0
    %364 = vmatprep.subr.mxu0 0.0
    %365 = vmatpush2.msra.mxu0 0.0
    %366 = vmatprep.subr.mxu0 0.0
    %367 = vmatpush2.msra.mxu0 0.0
    %368 = vmatprep.subr.mxu0 0.0
    %369 = vmatpush2.msra.mxu0 0.0
    %370 = vmatprep.subr.mxu0 0.0
    %371 = vmatpush2.msra.mxu0 0.0
    %372 = vmatprep.subr.mxu0 0.0
    %373 = vmatpush2.msra.mxu0 0.0
    %374 = vmatprep.subr.mxu0 0.0
    %375 = vmatpush2.msra.mxu0 0.0
    %376 = vmatprep.mubr.f32.mxu0 0.0
    %377 = vmatmul.mubr.f32.gmra.mxu0 %v279
    %v378 = vpop.f32.mrf.mxu0
    %v379 = vadd.f32 0.0, %v378
    %v380 = vpop.f32.mrf.mxu0
    %381 = vmatprep.mubr.f32.mxu0 0.0
    %382 = vmatmul.mubr.f32.gmra.mxu0 %v280
    %v383 = vpop.f32.mrf.mxu0
    %v384 = vadd.f32 0.0, %v383
    %v385 = vpop.f32.mrf.mxu0
    %386 = vmatprep.mubr.f32.mxu0 0.0
    %387 = vmatmul.mubr.f32.gmra.mxu0 %v281
    %v388 = vpop.f32.mrf.mxu0
    %v389 = vadd.f32 0.0, %v388
    %v390 = vpop.f32.mrf.mxu0
    %391 = vmatprep.mubr.f32.mxu0 0.0
    %392 = vmatmul.mubr.f32.gmra.mxu0 %v282
    %v393 = vpop.f32.mrf.mxu0
    %v394 = vadd.f32 0.0, %v393
    %v395 = vpop.f32.mrf.mxu0
    %396 = vmatprep.mubr.f32.mxu0 0.0
    %397 = vmatmul.mubr.f32.gmra.mxu0 %v283
    %v398 = vpop.f32.mrf.mxu0
    %v399 = vadd.f32 0.0, %v398
    %v400 = vpop.f32.mrf.mxu0
    %401 = vmatprep.mubr.f32.mxu0 0.0
    %402 = vmatmul.mubr.f32.gmra.mxu0 %v284
    %v403 = vpop.f32.mrf.mxu0
    %v404 = vadd.f32 0.0, %v403
    %v405 = vpop.f32.mrf.mxu0
    %406 = vmatprep.mubr.f32.mxu0 0.0
    %407 = vmatmul.mubr.f32.gmra.mxu0 %v285
    %v408 = vpop.f32.mrf.mxu0
    %v409 = vadd.f32 0.0, %v408
    %v410 = vpop.f32.mrf.mxu0
    %411 = vmatprep.mubr.f32.mxu0 0.0
    %412 = vmatmul.mubr.f32.gmra.mxu0 %v286
    %v413 = vpop.f32.mrf.mxu0
    %v414 = vadd.f32 0.0, %v413
    %v415 = vpop.f32.mrf.mxu0
    %416 = vmatprep.mubr.f32.mxu0 0.0
    %417 = vmatmul.mubr.f32.gmra.mxu0 %v287
    %v418 = vpop.f32.mrf.mxu0
    %v419 = vadd.f32 0.0, %v418
    %v420 = vpop.f32.mrf.mxu0
    %421 = vmatprep.mubr.f32.mxu0 0.0
    %422 = vmatmul.mubr.f32.gmra.mxu0 %v288
    %v423 = vpop.f32.mrf.mxu0
    %v424 = vadd.f32 0.0, %v423
    %v425 = vpop.f32.mrf.mxu0
    %426 = vmatprep.mubr.f32.mxu0 0.0
    %427 = vmatmul.mubr.f32.gmra.mxu0 %v289
    %v428 = vpop.f32.mrf.mxu0
    %v429 = vadd.f32 0.0, %v428
    %v430 = vpop.f32.mrf.mxu0
    %431 = vmatprep.mubr.f32.mxu0 0.0
    %432 = vmatmul.mubr.f32.gmra.mxu0 %v290
    %v433 = vpop.f32.mrf.mxu0
    %v434 = vadd.f32 0.0, %v433
    %v435 = vpop.f32.mrf.mxu0
    %436 = vmatprep.mubr.f32.mxu0 0.0
    %437 = vmatmul.mubr.f32.gmra.mxu0 %v291
    %v438 = vpop.f32.mrf.mxu0
    %v439 = vadd.f32 0.0, %v438
    %v440 = vpop.f32.mrf.mxu0
    %441 = vmatprep.mubr.f32.mxu0 0.0
    %442 = vmatmul.mubr.f32.gmra.mxu0 %v292
    %v443 = vpop.f32.mrf.mxu0
    %v444 = vadd.f32 0.0, %v443
    %v445 = vpop.f32.mrf.mxu0
    %446 = vmatprep.mubr.f32.mxu0 0.0
    %447 = vmatmul.mubr.f32.gmra.mxu0 %v293
    %v448 = vpop.f32.mrf.mxu0
    %v449 = vadd.f32 0.0, %v448
    %v450 = vpop.f32.mrf.mxu0
    %451 = vmatprep.mubr.f32.mxu0 0.0
    %452 = vmatmul.mubr.f32.gmra.mxu0 %v294
    %v453 = vpop.f32.mrf.mxu0
    %v454 = vadd.f32 0.0, %v453
    %v455 = vpop.f32.mrf.mxu0
    %456 = vdwg.mxu0
    %v458 = vlaneseq
    %v459 = vshrl.u32 %v458, 7
    %v460 = vsub.s32 0, %v459
    %v461 = vrot.slane %v311, %v460
    %463 = vmatprep.subr.mxu0 0.0
    %464 = vmatpush1.msra.mxu0 %v310
    %465 = vmatprep.subr.mxu0 0.0
    %466 = vmatpush1.msra.mxu0 %v309
    %467 = vmatprep.subr.mxu0 0.0
    %468 = vmatpush1.msra.mxu0 %v308
    %469 = vmatprep.subr.mxu0 0.0
    %470 = vmatpush1.msra.mxu0 %v307
    %471 = vmatprep.subr.mxu0 0.0
    %472 = vmatpush1.msra.mxu0 %v306
    %473 = vmatprep.subr.mxu0 0.0
    %474 = vmatpush1.msra.mxu0 %v305
    %475 = vmatprep.subr.mxu0 0.0
    %476 = vmatpush1.msra.mxu0 %v304
    %477 = vmatprep.subr.mxu0 0.0
    %478 = vmatpush1.msra.mxu0 %v303
    %479 = vmatprep.subr.mxu0 0.0
    %480 = vmatpush1.msra.mxu0 %v302
    %481 = vmatprep.subr.mxu0 0.0
    %482 = vmatpush1.msra.mxu0 %v301
    %483 = vmatprep.subr.mxu0 0.0
    %484 = vmatpush1.msra.mxu0 %v300
    %485 = vmatprep.subr.mxu0 0.0
    %486 = vmatpush1.msra.mxu0 %v299
    %487 = vmatprep.subr.mxu0 0.0
    %488 = vmatpush1.msra.mxu0 %v298
    %489 = vmatprep.subr.mxu0 0.0
    %490 = vmatpush1.msra.mxu0 %v297
    %491 = vmatprep.subr.mxu0 0.0
    %492 = vmatpush1.msra.mxu0 %v296
    %493 = vmatprep.subr.mxu0 0.0
    %494 = vmatpush1.msra.mxu0 %v295
    %495 = vmatprep.subr.mxu0 0.0
    %496 = vmatpush2.msra.mxu0 0.0
    %497 = vmatprep.subr.mxu0 0.0
    %498 = vmatpush2.msra.mxu0 0.0
    %499 = vmatprep.subr.mxu0 0.0
    %500 = vmatpush2.msra.mxu0 0.0
    %501 = vmatprep.subr.mxu0 0.0
    %502 = vmatpush2.msra.mxu0 0.0
    %503 = vmatprep.subr.mxu0 0.0
    %504 = vmatpush2.msra.mxu0 0.0
    %505 = vmatprep.subr.mxu0 0.0
    %506 = vmatpush2.msra.mxu0 0.0
    %507 = vmatprep.subr.mxu0 0.0
    %508 = vmatpush2.msra.mxu0 0.0
    %509 = vmatprep.subr.mxu0 0.0
    %510 = vmatpush2.msra.mxu0 0.0
    %511 = vmatprep.subr.mxu0 0.0
    %512 = vmatpush2.msra.mxu0 0.0
    %513 = vmatprep.subr.mxu0 0.0
    %514 = vmatpush2.msra.mxu0 0.0
    %515 = vmatprep.subr.mxu0 0.0
    %516 = vmatpush2.msra.mxu0 0.0
    %517 = vmatprep.subr.mxu0 0.0
    %518 = vmatpush2.msra.mxu0 0.0
    %519 = vmatprep.subr.mxu0 0.0
    %520 = vmatpush2.msra.mxu0 0.0
    %521 = vmatprep.subr.mxu0 0.0
    %522 = vmatpush2.msra.mxu0 0.0
    %523 = vmatprep.subr.mxu0 0.0
    %524 = vmatpush2.msra.mxu0 0.0
    %525 = vmatprep.subr.mxu0 0.0
    %526 = vmatpush2.msra.mxu0 0.0
    %527 = vmatprep.mubr.f32.mxu0 0.0
    %528 = vmatmul.mubr.f32.gmra.mxu0 %v379
    %v529 = vpop.f32.mrf.mxu0
    %v530 = vadd.f32 %v461, %v529
    %v531 = vpop.f32.mrf.mxu0
    %532 = vmatprep.mubr.f32.mxu0 0.0
    %533 = vmatmul.mubr.f32.gmra.mxu0 %v384
    %v534 = vpop.f32.mrf.mxu0
    %v535 = vadd.f32 %v461, %v534
    %v536 = vpop.f32.mrf.mxu0
    %537 = vmatprep.mubr.f32.mxu0 0.0
    %538 = vmatmul.mubr.f32.gmra.mxu0 %v389
    %v539 = vpop.f32.mrf.mxu0
    %v540 = vadd.f32 %v461, %v539
    %v541 = vpop.f32.mrf.mxu0
    %542 = vmatprep.mubr.f32.mxu0 0.0
    %543 = vmatmul.mubr.f32.gmra.mxu0 %v394
    %v544 = vpop.f32.mrf.mxu0
    %v545 = vadd.f32 %v461, %v544
    %v546 = vpop.f32.mrf.mxu0
    %547 = vmatprep.mubr.f32.mxu0 0.0
    %548 = vmatmul.mubr.f32.gmra.mxu0 %v399
    %v549 = vpop.f32.mrf.mxu0
    %v550 = vadd.f32 %v461, %v549
    %v551 = vpop.f32.mrf.mxu0
    %552 = vmatprep.mubr.f32.mxu0 0.0
    %553 = vmatmul.mubr.f32.gmra.mxu0 %v404
    %v554 = vpop.f32.mrf.mxu0
    %v555 = vadd.f32 %v461, %v554
    %v556 = vpop.f32.mrf.mxu0
    %557 = vmatprep.mubr.f32.mxu0 0.0
    %558 = vmatmul.mubr.f32.gmra.mxu0 %v409
    %v559 = vpop.f32.mrf.mxu0
    %v560 = vadd.f32 %v461, %v559
    %v561 = vpop.f32.mrf.mxu0
    %562 = vmatprep.mubr.f32.mxu0 0.0
    %563 = vmatmul.mubr.f32.gmra.mxu0 %v414
    %v564 = vpop.f32.mrf.mxu0
    %v565 = vadd.f32 %v461, %v564
    %v566 = vpop.f32.mrf.mxu0
    %567 = vmatprep.mubr.f32.mxu0 0.0
    %568 = vmatmul.mubr.f32.gmra.mxu0 %v419
    %v569 = vpop.f32.mrf.mxu0
    %v570 = vadd.f32 %v461, %v569
    %v571 = vpop.f32.mrf.mxu0
    %572 = vmatprep.mubr.f32.mxu0 0.0
    %573 = vmatmul.mubr.f32.gmra.mxu0 %v424
    %v574 = vpop.f32.mrf.mxu0
    %v575 = vadd.f32 %v461, %v574
    %v576 = vpop.f32.mrf.mxu0
    %577 = vmatprep.mubr.f32.mxu0 0.0
    %578 = vmatmul.mubr.f32.gmra.mxu0 %v429
    %v579 = vpop.f32.mrf.mxu0
    %v580 = vadd.f32 %v461, %v579
    %v581 = vpop.f32.mrf.mxu0
    %582 = vmatprep.mubr.f32.mxu0 0.0
    %583 = vmatmul.mubr.f32.gmra.mxu0 %v434
    %v584 = vpop.f32.mrf.mxu0
    %v585 = vadd.f32 %v461, %v584
    %v586 = vpop.f32.mrf.mxu0
    %587 = vmatprep.mubr.f32.mxu0 0.0
    %588 = vmatmul.mubr.f32.gmra.mxu0 %v439
    %v589 = vpop.f32.mrf.mxu0
    %v590 = vadd.f32 %v461, %v589
    %v591 = vpop.f32.mrf.mxu0
    %592 = vmatprep.mubr.f32.mxu0 0.0
    %593 = vmatmul.mubr.f32.gmra.mxu0 %v444
    %v594 = vpop.f32.mrf.mxu0
    %v595 = vadd.f32 %v461, %v594
    %v596 = vpop.f32.mrf.mxu0
    %597 = vmatprep.mubr.f32.mxu0 0.0
    %598 = vmatmul.mubr.f32.gmra.mxu0 %v449
    %v599 = vpop.f32.mrf.mxu0
    %v600 = vadd.f32 %v461, %v599
    %v601 = vpop.f32.mrf.mxu0
    %602 = vmatprep.mubr.f32.mxu0 0.0
    %603 = vmatmul.mubr.f32.gmra.mxu0 %v454
    %v604 = vpop.f32.mrf.mxu0
    %v605 = vadd.f32 %v461, %v604
    %v606 = vpop.f32.mrf.mxu0
    %607 = vdwg.mxu0
    %v608 = vmax.f32 %v530, 0.0
    %v609 = vmax.f32 %v535, 0.0
    %v610 = vmax.f32 %v540, 0.0
    %v611 = vmax.f32 %v545, 0.0
    %v612 = vmax.f32 %v550, 0.0
    %v613 = vmax.f32 %v555, 0.0
    %v614 = vmax.f32 %v560, 0.0
    %v615 = vmax.f32 %v565, 0.0
    %v616 = vmax.f32 %v570, 0.0
    %v617 = vmax.f32 %v575, 0.0
    %v618 = vmax.f32 %v580, 0.0
    %v619 = vmax.f32 %v585, 0.0
    %v620 = vmax.f32 %v590, 0.0
    %v621 = vmax.f32 %v595, 0.0
    %v622 = vmax.f32 %v600, 0.0
    %v623 = vmax.f32 %v605, 0.0
    %624 = vmatprep.subr.mxu0 0.0
    %625 = vmatpush1.msra.mxu0 %v623
    %626 = vmatprep.subr.mxu0 0.0
    %627 = vmatpush1.msra.mxu0 %v622
    %628 = vmatprep.subr.mxu0 0.0
    %629 = vmatpush1.msra.mxu0 %v621
    %630 = vmatprep.subr.mxu0 0.0
    %631 = vmatpush1.msra.mxu0 %v620
    %632 = vmatprep.subr.mxu0 0.0
    %633 = vmatpush1.msra.mxu0 %v619
    %634 = vmatprep.subr.mxu0 0.0
    %635 = vmatpush1.msra.mxu0 %v618
    %636 = vmatprep.subr.mxu0 0.0
    %637 = vmatpush1.msra.mxu0 %v617
    %638 = vmatprep.subr.mxu0 0.0
    %639 = vmatpush1.msra.mxu0 %v616
    %640 = vmatprep.subr.mxu0 0.0
    %641 = vmatpush1.msra.mxu0 %v615
    %642 = vmatprep.subr.mxu0 0.0
    %643 = vmatpush1.msra.mxu0 %v614
    %644 = vmatprep.subr.mxu0 0.0
    %645 = vmatpush1.msra.mxu0 %v613
    %646 = vmatprep.subr.mxu0 0.0
    %647 = vmatpush1.msra.mxu0 %v612
    %648 = vmatprep.subr.mxu0 0.0
    %649 = vmatpush1.msra.mxu0 %v611
    %650 = vmatprep.subr.mxu0 0.0
    %651 = vmatpush1.msra.mxu0 %v610
    %652 = vmatprep.subr.mxu0 0.0
    %653 = vmatpush1.msra.mxu0 %v609
    %654 = vmatprep.subr.mxu0 0.0
    %655 = vmatpush1.msra.mxu0 %v608
    %656 = vmatprep.subr.mxu0 0.0
    %657 = vmatpush2.msra.mxu0 0.0
    %658 = vmatprep.subr.mxu0 0.0
    %659 = vmatpush2.msra.mxu0 0.0
    %660 = vmatprep.subr.mxu0 0.0
    %661 = vmatpush2.msra.mxu0 0.0
    %662 = vmatprep.subr.mxu0 0.0
    %663 = vmatpush2.msra.mxu0 0.0
    %664 = vmatprep.subr.mxu0 0.0
    %665 = vmatpush2.msra.mxu0 0.0
    %666 = vmatprep.subr.mxu0 0.0
    %667 = vmatpush2.msra.mxu0 0.0
    %668 = vmatprep.subr.mxu0 0.0
    %669 = vmatpush2.msra.mxu0 0.0
    %670 = vmatprep.subr.mxu0 0.0
    %671 = vmatpush2.msra.mxu0 0.0
    %672 = vmatprep.subr.mxu0 0.0
    %673 = vmatpush2.msra.mxu0 0.0
    %674 = vmatprep.subr.mxu0 0.0
    %675 = vmatpush2.msra.mxu0 0.0
    %676 = vmatprep.subr.mxu0 0.0
    %677 = vmatpush2.msra.mxu0 0.0
    %678 = vmatprep.subr.mxu0 0.0
    %679 = vmatpush2.msra.mxu0 0.0
    %680 = vmatprep.subr.mxu0 0.0
    %681 = vmatpush2.msra.mxu0 0.0
    %682 = vmatprep.subr.mxu0 0.0
    %683 = vmatpush2.msra.mxu0 0.0
    %684 = vmatprep.subr.mxu0 0.0
    %685 = vmatpush2.msra.mxu0 0.0
    %686 = vmatprep.subr.mxu0 0.0
    %687 = vmatpush2.msra.mxu0 0.0
    %688 = vmatprep.mubr.f32.mxu0 0.0
    %689 = vmatmul.mubr.f32.gmra.mxu0 %v279
    %v690 = vpop.f32.mrf.mxu0
    %v691 = vadd.f32 0.0, %v690
    %v692 = vpop.f32.mrf.mxu0
    %693 = vmatprep.mubr.f32.mxu0 0.0
    %694 = vmatmul.mubr.f32.gmra.mxu0 %v280
    %v695 = vpop.f32.mrf.mxu0
    %v696 = vadd.f32 0.0, %v695
    %v697 = vpop.f32.mrf.mxu0
    %698 = vmatprep.mubr.f32.mxu0 0.0
    %699 = vmatmul.mubr.f32.gmra.mxu0 %v281
    %v700 = vpop.f32.mrf.mxu0
    %v701 = vadd.f32 0.0, %v700
    %v702 = vpop.f32.mrf.mxu0
    %703 = vmatprep.mubr.f32.mxu0 0.0
    %704 = vmatmul.mubr.f32.gmra.mxu0 %v282
    %v705 = vpop.f32.mrf.mxu0
    %v706 = vadd.f32 0.0, %v705
    %v707 = vpop.f32.mrf.mxu0
    %708 = vmatprep.mubr.f32.mxu0 0.0
    %709 = vmatmul.mubr.f32.gmra.mxu0 %v283
    %v710 = vpop.f32.mrf.mxu0
    %v711 = vadd.f32 0.0, %v710
    %v712 = vpop.f32.mrf.mxu0
    %713 = vmatprep.mubr.f32.mxu0 0.0
    %714 = vmatmul.mubr.f32.gmra.mxu0 %v284
    %v715 = vpop.f32.mrf.mxu0
    %v716 = vadd.f32 0.0, %v715
    %v717 = vpop.f32.mrf.mxu0
    %718 = vmatprep.mubr.f32.mxu0 0.0
    %719 = vmatmul.mubr.f32.gmra.mxu0 %v285
    %v720 = vpop.f32.mrf.mxu0
    %v721 = vadd.f32 0.0, %v720
    %v722 = vpop.f32.mrf.mxu0
    %723 = vmatprep.mubr.f32.mxu0 0.0
    %724 = vmatmul.mubr.f32.gmra.mxu0 %v286
    %v725 = vpop.f32.mrf.mxu0
    %v726 = vadd.f32 0.0, %v725
    %v727 = vpop.f32.mrf.mxu0
    %728 = vmatprep.mubr.f32.mxu0 0.0
    %729 = vmatmul.mubr.f32.gmra.mxu0 %v287
    %v730 = vpop.f32.mrf.mxu0
    %v731 = vadd.f32 0.0, %v730
    %v732 = vpop.f32.mrf.mxu0
    %733 = vmatprep.mubr.f32.mxu0 0.0
    %734 = vmatmul.mubr.f32.gmra.mxu0 %v288
    %v735 = vpop.f32.mrf.mxu0
    %v736 = vadd.f32 0.0, %v735
    %v737 = vpop.f32.mrf.mxu0
    %738 = vmatprep.mubr.f32.mxu0 0.0
    %739 = vmatmul.mubr.f32.gmra.mxu0 %v289
    %v740 = vpop.f32.mrf.mxu0
    %v741 = vadd.f32 0.0, %v740
    %v742 = vpop.f32.mrf.mxu0
    %743 = vmatprep.mubr.f32.mxu0 0.0
    %744 = vmatmul.mubr.f32.gmra.mxu0 %v290
    %v745 = vpop.f32.mrf.mxu0
    %v746 = vadd.f32 0.0, %v745
    %v747 = vpop.f32.mrf.mxu0
    %748 = vmatprep.mubr.f32.mxu0 0.0
    %749 = vmatmul.mubr.f32.gmra.mxu0 %v291
    %v750 = vpop.f32.mrf.mxu0
    %v751 = vadd.f32 0.0, %v750
    %v752 = vpop.f32.mrf.mxu0
    %753 = vmatprep.mubr.f32.mxu0 0.0
    %754 = vmatmul.mubr.f32.gmra.mxu0 %v292
    %v755 = vpop.f32.mrf.mxu0
    %v756 = vadd.f32 0.0, %v755
    %v757 = vpop.f32.mrf.mxu0
    %758 = vmatprep.mubr.f32.mxu0 0.0
    %759 = vmatmul.mubr.f32.gmra.mxu0 %v293
    %v760 = vpop.f32.mrf.mxu0
    %v761 = vadd.f32 0.0, %v760
    %v762 = vpop.f32.mrf.mxu0
    %763 = vmatprep.mubr.f32.mxu0 0.0
    %764 = vmatmul.mubr.f32.gmra.mxu0 %v294
    %v765 = vpop.f32.mrf.mxu0
    %v766 = vadd.f32 0.0, %v765
    %v767 = vpop.f32.mrf.mxu0
    %768 = vdwg.mxu0
    %769 = vmatprep.subr.mxu0 0.0
    %770 = vmatpush1.msra.mxu0 %v310
    %771 = vmatprep.subr.mxu0 0.0
    %772 = vmatpush1.msra.mxu0 %v309
    %773 = vmatprep.subr.mxu0 0.0
    %774 = vmatpush1.msra.mxu0 %v308
    %775 = vmatprep.subr.mxu0 0.0
    %776 = vmatpush1.msra.mxu0 %v307
    %777 = vmatprep.subr.mxu0 0.0
    %778 = vmatpush1.msra.mxu0 %v306
    %779 = vmatprep.subr.mxu0 0.0
    %780 = vmatpush1.msra.mxu0 %v305
    %781 = vmatprep.subr.mxu0 0.0
    %782 = vmatpush1.msra.mxu0 %v304
    %783 = vmatprep.subr.mxu0 0.0
    %784 = vmatpush1.msra.mxu0 %v303
    %785 = vmatprep.subr.mxu0 0.0
    %786 = vmatpush1.msra.mxu0 %v302
    %787 = vmatprep.subr.mxu0 0.0
    %788 = vmatpush1.msra.mxu0 %v301
    %789 = vmatprep.subr.mxu0 0.0
    %790 = vmatpush1.msra.mxu0 %v300
    %791 = vmatprep.subr.mxu0 0.0
    %792 = vmatpush1.msra.mxu0 %v299
    %793 = vmatprep.subr.mxu0 0.0
    %794 = vmatpush1.msra.mxu0 %v298
    %795 = vmatprep.subr.mxu0 0.0
    %796 = vmatpush1.msra.mxu0 %v297
    %797 = vmatprep.subr.mxu0 0.0
    %798 = vmatpush1.msra.mxu0 %v296
    %799 = vmatprep.subr.mxu0 0.0
    %800 = vmatpush1.msra.mxu0 %v295
    %801 = vmatprep.subr.mxu0 0.0
    %802 = vmatpush2.msra.mxu0 0.0
    %803 = vmatprep.subr.mxu0 0.0
    %804 = vmatpush2.msra.mxu0 0.0
    %805 = vmatprep.subr.mxu0 0.0
    %806 = vmatpush2.msra.mxu0 0.0
    %807 = vmatprep.subr.mxu0 0.0
    %808 = vmatpush2.msra.mxu0 0.0
    %809 = vmatprep.subr.mxu0 0.0
    %810 = vmatpush2.msra.mxu0 0.0
    %811 = vmatprep.subr.mxu0 0.0
    %812 = vmatpush2.msra.mxu0 0.0
    %813 = vmatprep.subr.mxu0 0.0
    %814 = vmatpush2.msra.mxu0 0.0
    %815 = vmatprep.subr.mxu0 0.0
    %816 = vmatpush2.msra.mxu0 0.0
    %817 = vmatprep.subr.mxu0 0.0
    %818 = vmatpush2.msra.mxu0 0.0
    %819 = vmatprep.subr.mxu0 0.0
    %820 = vmatpush2.msra.mxu0 0.0
    %821 = vmatprep.subr.mxu0 0.0
    %822 = vmatpush2.msra.mxu0 0.0
    %823 = vmatprep.subr.mxu0 0.0
    %824 = vmatpush2.msra.mxu0 0.0
    %825 = vmatprep.subr.mxu0 0.0
    %826 = vmatpush2.msra.mxu0 0.0
    %827 = vmatprep.subr.mxu0 0.0
    %828 = vmatpush2.msra.mxu0 0.0
    %829 = vmatprep.subr.mxu0 0.0
    %830 = vmatpush2.msra.mxu0 0.0
    %831 = vmatprep.subr.mxu0 0.0
    %832 = vmatpush2.msra.mxu0 0.0
    %833 = vmatprep.mubr.f32.mxu0 0.0
    %834 = vmatmul.mubr.f32.gmra.mxu0 %v691
    %v835 = vpop.f32.mrf.mxu0
    %v836 = vadd.f32 %v461, %v835
    %v837 = vpop.f32.mrf.mxu0
    %838 = vmatprep.mubr.f32.mxu0 0.0
    %839 = vmatmul.mubr.f32.gmra.mxu0 %v696
    %v840 = vpop.f32.mrf.mxu0
    %v841 = vadd.f32 %v461, %v840
    %v842 = vpop.f32.mrf.mxu0
    %843 = vmatprep.mubr.f32.mxu0 0.0
    %844 = vmatmul.mubr.f32.gmra.mxu0 %v701
    %v845 = vpop.f32.mrf.mxu0
    %v846 = vadd.f32 %v461, %v845
    %v847 = vpop.f32.mrf.mxu0
    %848 = vmatprep.mubr.f32.mxu0 0.0
    %849 = vmatmul.mubr.f32.gmra.mxu0 %v706
    %v850 = vpop.f32.mrf.mxu0
    %v851 = vadd.f32 %v461, %v850
    %v852 = vpop.f32.mrf.mxu0
    %853 = vmatprep.mubr.f32.mxu0 0.0
    %854 = vmatmul.mubr.f32.gmra.mxu0 %v711
    %v855 = vpop.f32.mrf.mxu0
    %v856 = vadd.f32 %v461, %v855
    %v857 = vpop.f32.mrf.mxu0
    %858 = vmatprep.mubr.f32.mxu0 0.0
    %859 = vmatmul.mubr.f32.gmra.mxu0 %v716
    %v860 = vpop.f32.mrf.mxu0
    %v861 = vadd.f32 %v461, %v860
    %v862 = vpop.f32.mrf.mxu0
    %863 = vmatprep.mubr.f32.mxu0 0.0
    %864 = vmatmul.mubr.f32.gmra.mxu0 %v721
    %v865 = vpop.f32.mrf.mxu0
    %v866 = vadd.f32 %v461, %v865
    %v867 = vpop.f32.mrf.mxu0
    %868 = vmatprep.mubr.f32.mxu0 0.0
    %869 = vmatmul.mubr.f32.gmra.mxu0 %v726
    %v870 = vpop.f32.mrf.mxu0
    %v871 = vadd.f32 %v461, %v870
    %v872 = vpop.f32.mrf.mxu0
    %873 = vmatprep.mubr.f32.mxu0 0.0
    %874 = vmatmul.mubr.f32.gmra.mxu0 %v731
    %v875 = vpop.f32.mrf.mxu0
    %v876 = vadd.f32 %v461, %v875
    %v877 = vpop.f32.mrf.mxu0
    %878 = vmatprep.mubr.f32.mxu0 0.0
    %879 = vmatmul.mubr.f32.gmra.mxu0 %v736
    %v880 = vpop.f32.mrf.mxu0
    %v881 = vadd.f32 %v461, %v880
    %v882 = vpop.f32.mrf.mxu0
    %883 = vmatprep.mubr.f32.mxu0 0.0
    %884 = vmatmul.mubr.f32.gmra.mxu0 %v741
    %v885 = vpop.f32.mrf.mxu0
    %v886 = vadd.f32 %v461, %v885
    %v887 = vpop.f32.mrf.mxu0
    %888 = vmatprep.mubr.f32.mxu0 0.0
    %889 = vmatmul.mubr.f32.gmra.mxu0 %v746
    %v890 = vpop.f32.mrf.mxu0
    %v891 = vadd.f32 %v461, %v890
    %v892 = vpop.f32.mrf.mxu0
    %893 = vmatprep.mubr.f32.mxu0 0.0
    %894 = vmatmul.mubr.f32.gmra.mxu0 %v751
    %v895 = vpop.f32.mrf.mxu0
    %v896 = vadd.f32 %v461, %v895
    %v897 = vpop.f32.mrf.mxu0
    %898 = vmatprep.mubr.f32.mxu0 0.0
    %899 = vmatmul.mubr.f32.gmra.mxu0 %v756
    %v900 = vpop.f32.mrf.mxu0
    %v901 = vadd.f32 %v461, %v900
    %v902 = vpop.f32.mrf.mxu0
    %903 = vmatprep.mubr.f32.mxu0 0.0
    %904 = vmatmul.mubr.f32.gmra.mxu0 %v761
    %v905 = vpop.f32.mrf.mxu0
    %v906 = vadd.f32 %v461, %v905
    %v907 = vpop.f32.mrf.mxu0
    %908 = vmatprep.mubr.f32.mxu0 0.0
    %909 = vmatmul.mubr.f32.gmra.mxu0 %v766
    %v910 = vpop.f32.mrf.mxu0
    %v911 = vadd.f32 %v461, %v910
    %v912 = vpop.f32.mrf.mxu0
    %913 = vdwg.mxu0
    %v914 = vmax.f32 %v836, 0.0
    %v915 = vmax.f32 %v841, 0.0
    %v916 = vmax.f32 %v846, 0.0
    %v917 = vmax.f32 %v851, 0.0
    %v918 = vmax.f32 %v856, 0.0
    %v919 = vmax.f32 %v861, 0.0
    %v920 = vmax.f32 %v866, 0.0
    %v921 = vmax.f32 %v871, 0.0
    %v922 = vmax.f32 %v876, 0.0
    %v923 = vmax.f32 %v881, 0.0
    %v924 = vmax.f32 %v886, 0.0
    %v925 = vmax.f32 %v891, 0.0
    %v926 = vmax.f32 %v896, 0.0
    %v927 = vmax.f32 %v901, 0.0
    %v928 = vmax.f32 %v906, 0.0
    %v929 = vmax.f32 %v911, 0.0
    %930 = vst [vmem:[#allocation10] sm:$0xff] %v914
    %931 = vst [vmem:[#allocation10 + $0x8] sm:$0xff] %v915
    %932 = vst [vmem:[#allocation10 + $0x10] sm:$0xff] %v916
    %933 = vst [vmem:[#allocation10 + $0x18] sm:$0xff] %v917
    %934 = vst [vmem:[#allocation10 + $0x20] sm:$0xff] %v918
    %935 = vst [vmem:[#allocation10 + $0x28] sm:$0xff] %v919
    %936 = vst [vmem:[#allocation10 + $0x30] sm:$0xff] %v920
    %937 = vst [vmem:[#allocation10 + $0x38] sm:$0xff] %v921
    %938 = vst [vmem:[#allocation10 + $0x40] sm:$0xff] %v922
    %939 = vst [vmem:[#allocation10 + $0x48] sm:$0xff] %v923
    %940 = vst [vmem:[#allocation10 + $0x50] sm:$0xff] %v924
    %941 = vst [vmem:[#allocation10 + $0x58] sm:$0xff] %v925
    %942 = vst [vmem:[#allocation10 + $0x60] sm:$0xff] %v926
    %943 = vst [vmem:[#allocation10 + $0x68] sm:$0xff] %v927
    %944 = vst [vmem:[#allocation10 + $0x70] sm:$0xff] %v928
    %945 = vst [vmem:[#allocation10 + $0x78] sm:$0xff] %v929
    // Predicated region
    $region42: #{tpu_custom_call.1} parent=1 // pred_check
      _
    $region43: #{tpu_custom_call.1} parent=1 // pred_check_branch
      %947 = sbr.rel (0) target = $region45
    $region44: #{tpu_custom_call.1} parent=1 // pred_region
      %s949 = ssub.s32 2048, 2048
      %950 = vsyncadd [#allocation4], %s949
      %s951 = sshll.u32 [#allocation10], 4
      %s952 = int_to_ptr.vmem [resolvable:$true] %s951
      %957 = dma.vmem_to_hbm [thread:$0]  %s952, 2048, %s6, [#allocation4], 128, 128, 8
    $region45: #{tpu_custom_call.1} parent=1 // pred_fallthru
      _
    // Predicated region
    $region46: #{tpu_custom_call.1} parent=1 // pred_check
      _
    $region47: #{tpu_custom_call.1} parent=1 // pred_check_branch
      %959 = sbr.rel (0) target = $region49
    $region48: #{tpu_custom_call.1} parent=1 // pred_region
      %960 = dma.done [#allocation4], 2048
    $region49: #{tpu_custom_call.1} parent=1 // pred_fallthru
      _
    %961 = vsyncpa [#allocation3], 1
    %962 = vsyncpa [#allocation6], 1
    %963 = vsyncpa [#allocation9], 1
    %964 = vsyncpa [#allocation4], 1

</llo_original>
